<compile_context>
chip_gen: v5e
topology: v5e:2x2
jax: 0.10.0
libtpu: 0.0.40
codegen_flags: <defaults>
</compile_context>

<pallas_src>
import functools

import jax
import jax.numpy as jnp
from jax.experimental import pallas as pl
from jax.experimental.pallas import tpu as pltpu


def _pooler_kernel(x_ref, w_ref, b_ref, o_ref):
    # x_ref: [tm, H]  bf16 first-token activations (resident across the N axis)
    # w_ref: [H, tn]  bf16 weight slab, [in, out] layout (marches over N)
    # b_ref: [1, tn]  f32 bias slab
    # o_ref: [tm, tn] output tile
    acc = jnp.dot(x_ref[...], w_ref[...], preferred_element_type=jnp.float32)
    acc = acc + b_ref[...]
    o_ref[...] = jnp.tanh(acc).astype(o_ref.dtype)


@functools.lru_cache(maxsize=1)
def _vmem_capacity_bytes() -> int:
    """Physical VMEM per TensorCore; conservative fallback if the query fails."""
    try:
        info = pltpu.get_tpu_info()
        cap = int(getattr(info, "vmem_capacity_bytes", 0))
        if cap > 0:
            return cap
    except Exception:
        pass
    return 64 << 20  # v7x per-core size: safe lower bound across generations


def prepare_pooler_params(weight, bias, *, compute_dtype=jnp.bfloat16):
    """One-time prep: cast W to bf16 and transpose to [in, out]; bias -> f32 [1, H]."""
    w_t = jnp.asarray(weight).astype(compute_dtype).T             # [in, out]
    b2d = jnp.asarray(bias).astype(jnp.float32).reshape(1, -1)    # [1, out]
    return w_t, b2d


@functools.partial(jax.jit, static_argnames=("block_b", "block_n", "compute_dtype"))
def bert_pooler_prepared(hidden_states, w_t, b2d, *, block_b=256, block_n=512,
                         compute_dtype=jnp.bfloat16):
    """hidden_states: [B, S, H]; w_t: [H, H] pre-transposed [in, out]; b2d: [1, H] f32."""
    B, _, H = hidden_states.shape
    out_dtype = hidden_states.dtype

    # Cheap XLA glue: token-0 slice + bf16 cast of the small activation stream.
    x = hidden_states[:, 0, :].astype(compute_dtype)               # [B, H]

    # Tile sizes. Full-array blocks always satisfy the (8,128) rule; otherwise
    # tm is sublane-aligned (multiple of 8) and tn lane-aligned (multiple of 128).
    tm = B if B <= block_b else block_b
    tn = H if H <= block_n else block_n
    nb = pl.cdiv(B, tm)
    nn = pl.cdiv(H, tn)

    # Honest VMEM budget: per-operand dtype, double-buffered tiles, clamped to
    # ~85% of this generation's physical VMEM (64 MiB/core on v7x).
    xb = jnp.dtype(compute_dtype).itemsize
    wb = jnp.dtype(w_t.dtype).itemsize
    ob = jnp.dtype(out_dtype).itemsize
    est = 2 * tm * H * xb + 2 * H * tn * wb + 2 * tm * tn * ob + 2 * tn * 4
    vmem_limit = int(min(int(0.85 * _vmem_capacity_bytes()),
                         max(est + (8 << 20), 32 << 20)))

    # Grid: N (weight output columns) outer & "parallel" -> W is read from HBM
    # exactly once and, on v7x, each TensorCore fetches only its own W columns.
    # Batch inner & "arbitrary": only the small x tile is re-read (nn times),
    # negligible next to the H*H weight stream.
    out = pl.pallas_call(
        _pooler_kernel,
        out_shape=jax.ShapeDtypeStruct((B, H), out_dtype),
        grid=(nn, nb),
        in_specs=[
            pl.BlockSpec((tm, H), lambda j, i: (i, 0)),   # x: constant over N
            pl.BlockSpec((H, tn), lambda j, i: (0, j)),   # W: marches over N
            pl.BlockSpec((1, tn), lambda j, i: (0, j)),   # bias slab
        ],
        out_specs=pl.BlockSpec((tm, tn), lambda j, i: (i, j)),
        compiler_params=pltpu.CompilerParams(
            dimension_semantics=("parallel", "arbitrary"),
            vmem_limit_bytes=vmem_limit,
        ),
    )(x, w_t, b2d)
    return out


def bert_pooler(hidden_states, weight, bias, **kwargs):
    """Convenience wrapper taking the PyTorch-layout [out, in] weight."""
    w_t, b2d = prepare_pooler_params(weight, bias)
    return bert_pooler_prepared(hidden_states, w_t, b2d, **kwargs)


if __name__ == "__main__":
    key = jax.random.PRNGKey(0)
    k_x, k_w, k_b, k_x2, k_w2, k_b2 = jax.random.split(key, 6)

    # Small shapes consistent with the module: batch=2, seq=8, hidden=32.
    B, S, H = 2, 8, 32
    hidden_states = jax.random.normal(k_x, (B, S, H), dtype=jnp.float32)
    weight = jax.random.normal(k_w, (H, H), dtype=jnp.float32) * 0.02   # [out, in]
    bias = jax.random.normal(k_b, (H,), dtype=jnp.float32) * 0.02

    out = jax.block_until_ready(bert_pooler(hidden_states, weight, bias))
    assert out.shape == (B, H) and out.dtype == hidden_states.dtype

    # Reference (f32 math, same semantics as the PyTorch forward); loose
    # tolerance because the kernel feeds the MXU bf16 operands.
    ref = jnp.tanh(hidden_states[:, 0, :] @ weight.T + bias)
    assert jnp.allclose(out, ref, atol=2e-2, rtol=2e-2)
    # Tight check against a reference using the same bf16 operand feed.
    ref_bf16 = jnp.tanh(
        jnp.dot(hidden_states[:, 0, :].astype(jnp.bfloat16),
                weight.astype(jnp.bfloat16).T,
                preferred_element_type=jnp.float32) + bias)
    assert jnp.allclose(out, ref_bf16, atol=1e-4, rtol=1e-4)

    # Ragged, multi-tile exercise: B not a multiple of the batch tile, 2 N tiles.
    B2, S2, H2 = 10, 4, 256
    hs2 = jax.random.normal(k_x2, (B2, S2, H2), dtype=jnp.float32)
    w2 = jax.random.normal(k_w2, (H2, H2), dtype=jnp.float32) * 0.02
    b2 = jax.random.normal(k_b2, (H2,), dtype=jnp.float32) * 0.02
    out2 = jax.block_until_ready(bert_pooler(hs2, w2, b2, block_b=8, block_n=128))
    ref2 = jnp.tanh(hs2[:, 0, :] @ w2.T + b2)
    assert out2.shape == (B2, H2)
    assert jnp.allclose(out2, ref2, atol=2e-2, rtol=2e-2)

    print("KERNEL_OK")
</pallas_src>

<mosaic_0001>
module attributes {stable_mosaic.version = 11 : i64} {
  func.func @_pooler_kernel(%arg0: i32, %arg1: i32, %arg2: memref<2x32xbf16, #tpu.memory_space<vmem>>, %arg3: memref<32x32xbf16, #tpu.memory_space<vmem>>, %arg4: memref<1x32xf32, #tpu.memory_space<vmem>>, %arg5: memref<2x32xf32, #tpu.memory_space<vmem>>) attributes {dimension_semantics = [#tpu.dimension_semantics<parallel>, #tpu.dimension_semantics<arbitrary>], iteration_bounds = array<i64: 1, 1>, scalar_prefetch = 0 : i64, scratch_operands = 0 : i64, tpu.core_type = #tpu.core_type<tc>, window_params = [{transform_indices = @transform_0, window_bounds = array<i64: 2, 32>}, {transform_indices = @transform_1, window_bounds = array<i64: 32, 32>}, {transform_indices = @transform_2, window_bounds = array<i64: 1, 32>}, {transform_indices = @transform_3, window_bounds = array<i64: 2, 32>}]} {
    %c0 = arith.constant 0 : index
    %c0_0 = arith.constant 0 : index
    %0 = vector.load %arg2[%c0, %c0_0] : memref<2x32xbf16, #tpu.memory_space<vmem>>, vector<2x32xbf16>
    %c0_1 = arith.constant 0 : index
    %c0_2 = arith.constant 0 : index
    %1 = vector.load %arg3[%c0_1, %c0_2] : memref<32x32xbf16, #tpu.memory_space<vmem>>, vector<32x32xbf16>
    %cst = arith.constant dense<0.000000e+00> : vector<2x32xf32>
    %2 = tpu.matmul %0, %1, %cst {dimension_numbers = #tpu.dot_dimension_numbers<[1], [0], [0], [1], [0, 0, 1, 1], [], []>} : vector<2x32xbf16>, vector<32x32xbf16>, vector<2x32xf32> -> vector<2x32xf32>
    %c0_3 = arith.constant 0 : index
    %c0_4 = arith.constant 0 : index
    %3 = vector.load %arg4[%c0_3, %c0_4] : memref<1x32xf32, #tpu.memory_space<vmem>>, vector<1x32xf32>
    %4 = vector.broadcast %3 : vector<1x32xf32> to vector<2x32xf32>
    %5 = arith.addf %2, %4 : vector<2x32xf32>
    %6 = math.tanh %5 : vector<2x32xf32>
    %c0_5 = arith.constant 0 : index
    %c0_6 = arith.constant 0 : index
    %7 = vector.load %arg5[%c0_5, %c0_6] : memref<2x32xf32, #tpu.memory_space<vmem>>, vector<2x32xf32>
    tpu.vector_store %arg5[%c0_5, %c0_6], %6 {strides = array<i32>} : memref<2x32xf32, #tpu.memory_space<vmem>>, vector<2x32xf32>,
    return
  }
  func.func @transform_0(%arg0: i32, %arg1: i32) -> (i32, i32) {
    %c0_i32 = arith.constant 0 : i32
    %c0_i32_0 = arith.constant 0 : i32
    return %arg1, %c0_i32 : i32, i32
  }
  func.func @transform_1(%arg0: i32, %arg1: i32) -> (i32, i32) {
    %c0_i32 = arith.constant 0 : i32
    %c0_i32_0 = arith.constant 0 : i32
    return %c0_i32, %arg0 : i32, i32
  }
  func.func @transform_2(%arg0: i32, %arg1: i32) -> (i32, i32) {
    %c0_i32 = arith.constant 0 : i32
    %c0_i32_0 = arith.constant 0 : i32
    return %c0_i32, %arg0 : i32, i32
  }
  func.func @transform_3(%arg0: i32, %arg1: i32) -> (i32, i32) {
    %c0_i32 = arith.constant 0 : i32
    return %arg1, %arg0 : i32, i32
  }
}

</mosaic_0001>

<llo_original>
// kernel: bert_pooler_prepared.1
$region0: #{bert_pooler_prepared.1}
  #allocation0 [shape = 'u32[]', space=smem, size = 0x4, offset = 0x4, fixed_abs, tag = 'smem constant byte address 0x4 - core index']
  #allocation1 [shape = 'u32[72,128]{1,0:T(1,128)}', space=vmem, size = 0x9000, scoped, tag = 'internal scratch']
  %s0 = inlined_call_operand.vmem [shape: bf16[2,32], index: 0, kind: input, shape index: {}]
  %s1 = inlined_call_operand.hbm [shape: bf16[32,32], index: 1, kind: input, shape index: {}]
  %s2 = inlined_call_operand.vmem [shape: f32[1,32], index: 2, kind: input, shape index: {}]
  %s3 = inlined_call_operand.hbm [shape: f32[2,32], index: 3, kind: output, shape index: {}]
  %s4 = sld [smem:[#allocation0]]
  $region26: #{bert_pooler_prepared.1} parent=0
    _
  %s6 = ssub.s32 1, %s4
  %s7 = scalar_select 0, %s6, %s4
  $region1: #{bert_pooler_prepared.1} parent=0
    #allocation2 [shape = 'u8[8192]{0}', space=vmem, size = 0x2000, scoped, tag = 'input window, operand 1, single buffered']
    #allocation3 [shape = 's32[1]{0}', space=sflag, size = 0x4, scoped, tag = 'scoped memory for bert_pooler_prepared.1']
    #allocation4 [shape = 's32[1]{0}', space=sflag, size = 0x4, scoped, tag = 'scoped memory for bert_pooler_prepared.1']
    #allocation5 [shape = 'u8[1024]{0}', space=vmem, size = 0x400, scoped, tag = 'output window, operand 0, single buffered']
    %8 = vsyncpa [#allocation3], 0
    %9 = vsyncpa [#allocation4], 0
    // Predicated region
    $region2: #{bert_pooler_prepared.1} parent=1 // pred_check
      _
    $region3: #{bert_pooler_prepared.1} parent=1 // pred_check_branch
      %11 = sbr.rel (0) target = $region5
    $region4: #{bert_pooler_prepared.1} parent=1 // pred_region
      _
    $region5: #{bert_pooler_prepared.1} parent=1 // pred_fallthru
      _
    // Predicated region
    $region6: #{bert_pooler_prepared.1} parent=1 // pred_check
      _
    $region7: #{bert_pooler_prepared.1} parent=1 // pred_check_branch
      %13 = sbr.rel (0) target = $region9
    $region8: #{bert_pooler_prepared.1} parent=1 // pred_region
      %15 = vsyncadd [#allocation3], 0
      %s16 = sshll.u32 %s1, 4
      %s17 = int_to_ptr.hbm [resolvable:$true] %s16
      %s18 = sshll.u32 [#allocation2], 4
      %s19 = int_to_ptr.vmem [resolvable:$true] %s18
      %24 = dma.hbm_to_vmem [thread:$0]  %s17, 256, %s19, [#allocation3], 64, 64, 4
    $region9: #{bert_pooler_prepared.1} parent=1 // pred_fallthru
      _
    // Predicated region
    $region10: #{bert_pooler_prepared.1} parent=1 // pred_check
      _
    $region11: #{bert_pooler_prepared.1} parent=1 // pred_check_branch
      %26 = sbr.rel (0) target = $region13
    $region12: #{bert_pooler_prepared.1} parent=1 // pred_region
      _
    $region13: #{bert_pooler_prepared.1} parent=1 // pred_fallthru
      _
    // Predicated region
    $region14: #{bert_pooler_prepared.1} parent=1 // pred_check
      _
    $region15: #{bert_pooler_prepared.1} parent=1 // pred_check_branch
      %28 = sbr.rel (0) target = $region17
    $region16: #{bert_pooler_prepared.1} parent=1 // pred_region
      %30 = dma.done [#allocation3], 256
    $region17: #{bert_pooler_prepared.1} parent=1 // pred_fallthru
      _
    %v32 = vld [vmem:[%s0] sm:$0x1]
    %v33 = vld [vmem:[#allocation2] sm:$0xf]
    %v34 = vld [vmem:[#allocation2 + $0x4] sm:$0xf]
    %v35 = vld [vmem:[#allocation2 + $0x8] sm:$0xf]
    %v36 = vld [vmem:[#allocation2 + $0xc] sm:$0xf]
    %v37 = vld [vmem:[%s2] sm:$0x1]
    %v39 = vperm.slane %v37, 0
    %v45 = vunpack.c.l.b16 %v33
    %v46 = vunpack.c.l.b16 %v34
    %v47 = vunpack.c.l.b16 %v35
    %v48 = vunpack.c.l.b16 %v36
    %v49 = vpack.c.b16 %v46, %v45
    %v50 = vpack.c.b16 %v48, %v47
    %vm53 = vcmask 261120
    %v55 = vsel %vm53, %v32, 0
    %57 = vmatpush.bf16.msra.mxu0 0
    %58 = vmatpush.bf16.msra.mxu0 0
    %59 = vmatpush.bf16.msra.mxu0 0
    %60 = vmatpush.bf16.msra.mxu0 0
    %61 = vmatpush.bf16.msra.mxu0 0
    %62 = vmatpush.bf16.msra.mxu0 0
    %63 = vmatpush.bf16.msra.mxu0 %v50
    %64 = vmatpush.bf16.msra.mxu0 %v49
    %65 = vmatmul.bf16.gmra.mxu0 %v55
    %v66 = vpop.f32.mrf.mxu0
    %v67 = vadd.f32 %v39, %v66
    %v68 = vpop.f32.mrf.mxu0
    %69 = vdwg.mxu0
    %v70 = vtanh.pop %v67
    %vm71 = vcmask 254976
    %72 = vst.msk [vmem:[#allocation5] sm:$0x3] %vm71, %v70
    // Predicated region
    $region18: #{bert_pooler_prepared.1} parent=1 // pred_check
      _
    $region19: #{bert_pooler_prepared.1} parent=1 // pred_check_branch
      %74 = sbr.rel (0) target = $region21
    $region20: #{bert_pooler_prepared.1} parent=1 // pred_region
      %76 = vsyncadd [#allocation4], 0
      %s78 = sshll.u32 [#allocation5], 4
      %s79 = int_to_ptr.vmem [resolvable:$true] %s78
      %s80 = sshll.u32 %s3, 4
      %s81 = int_to_ptr.hbm [resolvable:$true] %s80
      %83 = dma.vmem_to_hbm [thread:$0]  %s79, 32, %s81, [#allocation4]
    $region21: #{bert_pooler_prepared.1} parent=1 // pred_fallthru
      _
    // Predicated region
    $region22: #{bert_pooler_prepared.1} parent=1 // pred_check
      _
    $region23: #{bert_pooler_prepared.1} parent=1 // pred_check_branch
      %85 = sbr.rel (0) target = $region25
    $region24: #{bert_pooler_prepared.1} parent=1 // pred_region
      %87 = dma.done [#allocation4], 32
    $region25: #{bert_pooler_prepared.1} parent=1 // pred_fallthru
      _
    %88 = vsyncpa [#allocation3], 1
    %89 = vsyncpa [#allocation4], 1

</llo_original>
